<compile_context>
chip_gen: v6e
topology: v6e:2x2x1
jax: 0.10.0
libtpu: 0.0.40
codegen_flags: <defaults>
</compile_context>

<pallas_src>
import jax
import jax.numpy as jnp
from jax.experimental import pallas as pl
from jax.experimental.pallas import tpu as pltpu

MXU_DTYPE = jnp.bfloat16  # matmul operand dtype (accumulation is always f32)


# --------------------------------------------------------------------------- #
# Helpers
# --------------------------------------------------------------------------- #
def _round_up(x, m):
    return ((x + m - 1) // m) * m


def _elu(y):
    # expm1 only ever sees non-positive values (no overflow on the dead branch)
    return jnp.where(y > 0.0, y, jnp.expm1(jnp.minimum(y, 0.0)))


def _pad2d(x, rows, cols):
    r, c = x.shape
    if r == rows and c == cols:
        return x
    return jnp.pad(x, ((0, rows - r), (0, cols - c)))


# --------------------------------------------------------------------------- #
# Tiled matmul with fused bias: y = a @ b + bias
#   * accumulates directly into the (k-invariant) f32 output block (no scratch)
#   * exact (M, N) output shape — partial edge blocks are masked on store
# --------------------------------------------------------------------------- #
def _mm_kernel(a_ref, b_ref, bias_ref, o_ref):
    @pl.when(pl.program_id(2) == 0)
    def _():
        o_ref[...] = jnp.zeros_like(o_ref)

    o_ref[...] += jnp.dot(a_ref[...], b_ref[...],
                          preferred_element_type=jnp.float32)

    @pl.when(pl.program_id(2) == pl.num_programs(2) - 1)
    def _():
        o_ref[...] = o_ref[...] + bias_ref[...]


def pallas_matmul_bias(a, b, bias, *, tm=256, tn=256, tk_max=1024):
    """y = a @ b + bias.  a:(M,K) any float dtype, b:(K,N), bias:(N,) -> (M,N) f32."""
    M, K = a.shape
    K2, N = b.shape
    assert K == K2

    tm = min(tm, _round_up(M, 8))                 # no M padding; partial blocks masked
    k_aligned = _round_up(K, 128)
    tk = k_aligned if k_aligned <= tk_max else 512  # single K tile in the common case
    Kp = _round_up(K, tk)                         # K must be zero-padded (reduction axis)
    tn = min(tn, _round_up(N, 128))
    Np = _round_up(N, tn)                         # pad only the small weight/bias operands

    a_p = a.astype(MXU_DTYPE)
    if Kp != K:
        a_p = jnp.pad(a_p, ((0, 0), (0, Kp - K)))
    b_p = _pad2d(b.astype(MXU_DTYPE), Kp, Np)
    bias_p = _pad2d(bias.reshape(1, N).astype(jnp.float32), 1, Np)

    return pl.pallas_call(
        _mm_kernel,
        grid=(pl.cdiv(M, tm), Np // tn, Kp // tk),
        out_shape=jax.ShapeDtypeStruct((M, N), jnp.float32),
        in_specs=[
            pl.BlockSpec((tm, tk), lambda i, j, k: (i, k)),
            pl.BlockSpec((tk, tn), lambda i, j, k: (k, j)),
            pl.BlockSpec((1, tn), lambda i, j, k: (0, j)),
        ],
        out_specs=pl.BlockSpec((tm, tn), lambda i, j, k: (i, j)),
        compiler_params=pltpu.CompilerParams(
            dimension_semantics=("parallel", "parallel", "arbitrary")),
    )(a_p, b_p, bias_p)


# --------------------------------------------------------------------------- #
# GATv2 attention logits: logits_e = sum_h att[h] * LeakyReLU(z[e, h])
# (z = x_l[src] + x_r[dst] + rel_proj[rel] is pre-summed in XLA, fused with the gathers,
#  so the kernel streams a single (E, H) operand.)
# --------------------------------------------------------------------------- #
def _gat_logit_kernel(z_ref, att_ref, o_ref):
    z = z_ref[...]
    z = jnp.where(z > 0.0, z, 0.2 * z)                    # LeakyReLU(0.2)
    o_ref[...] = jnp.sum(z * att_ref[...], axis=-1, keepdims=True)


def pallas_gat_logits(z, att, *, te=1024):
    """z: (E,H) f32; att: (1,H) f32 -> logits (E,) f32."""
    E, H = z.shape
    te = min(te, _round_up(E, 8))
    out = pl.pallas_call(
        _gat_logit_kernel,
        grid=(pl.cdiv(E, te),),
        out_shape=jax.ShapeDtypeStruct((E, 1), jnp.float32),
        in_specs=[
            pl.BlockSpec((te, H), lambda i: (i, 0)),
            pl.BlockSpec((1, H), lambda i: (0, 0)),
        ],
        out_specs=pl.BlockSpec((te, 1), lambda i: (i, 0)),
        compiler_params=pltpu.CompilerParams(dimension_semantics=("parallel",)),
    )(z, att)
    return out[:, 0]


# --------------------------------------------------------------------------- #
# RESCAL decoder (diagonal): score[r, i, j] = (E_i * rel_r) @ E_j^T
#   * exact (R, N, N) output, ej pre-transposed to (F, N) bf16 -> clean (M,K)@(K,N) feed
# --------------------------------------------------------------------------- #
def _rescal_kernel(ei_ref, ejT_ref, rel_ref, o_ref):
    scaled = (ei_ref[...] * rel_ref[0]).astype(MXU_DTYPE)   # bf16 * f32 -> f32 -> bf16
    o_ref[0] = jnp.dot(scaled, ejT_ref[...],
                       preferred_element_type=jnp.float32).astype(o_ref.dtype)


def pallas_rescal_diagonal(ent, rel, *, t=512, out_dtype=jnp.float32):
    """ent: (N,F), rel: (R,F) -> score (R,N,N) in out_dtype (f32 default, bf16 optional)."""
    N, F = ent.shape
    R = rel.shape[0]
    t = N if N <= t else t                        # t multiple of 128, or == N

    ent_b = ent.astype(MXU_DTYPE)                 # bf16 operands in HBM (half the DMA bytes)
    entT_b = ent_b.T                              # (F, N) one-time transpose
    rel3 = rel.astype(jnp.float32).reshape(R, 1, F)

    return pl.pallas_call(
        _rescal_kernel,
        grid=(pl.cdiv(N, t), pl.cdiv(N, t), R),
        out_shape=jax.ShapeDtypeStruct((R, N, N), out_dtype),
        in_specs=[
            pl.BlockSpec((t, F), lambda i, j, r: (i, 0)),
            pl.BlockSpec((F, t), lambda i, j, r: (0, j)),
            pl.BlockSpec((1, 1, F), lambda i, j, r: (r, 0, 0)),
        ],
        out_specs=pl.BlockSpec((1, t, t), lambda i, j, r: (r, i, j)),
        compiler_params=pltpu.CompilerParams(
            dimension_semantics=("parallel", "parallel", "arbitrary")),
    )(ent_b, entT_b, rel3)


# --------------------------------------------------------------------------- #
# Parameters (deterministic synthetic init; weights stored pre-transposed (K, Nout))
# --------------------------------------------------------------------------- #
def init_params(key, n_features, h_dim):
    ks = jax.random.split(key, 8)

    def lin(k, n_in, n_out):
        scale = 1.0 / jnp.sqrt(jnp.float32(n_in))
        kw, kb = jax.random.split(k)
        w = jax.random.uniform(kw, (n_in, n_out), jnp.float32, -scale, scale)
        b = jax.random.uniform(kb, (n_out,), jnp.float32, -scale, scale)
        return w, b

    p = {}
    w_l, b_l = lin(ks[0], n_features, h_dim)              # GATv2 lin_l (source)
    w_r, b_r = lin(ks[1], n_features, h_dim)              # GATv2 lin_r (target)
    p["w_lr"] = jnp.concatenate([w_l, w_r], axis=1)       # fused (F, 2H)
    p["b_lr"] = jnp.concatenate([b_l, b_r], axis=0)       # (2H,)
    p["w_e"], p["b_e"] = lin(ks[2], n_features, h_dim)    # GATv2 lin_edge (F, H)
    p["att"] = jax.random.normal(ks[3], (1, h_dim), jnp.float32) / jnp.sqrt(
        jnp.float32(h_dim))
    p["b_gat"] = jnp.zeros((h_dim,), jnp.float32)
    p["w_out"], p["b_out"] = lin(ks[4], h_dim, n_features)       # (H, F)
    p["w_rel"], p["b_rel"] = lin(ks[5], n_features, n_features)  # (F, F)
    return p


# --------------------------------------------------------------------------- #
# Forward pass (mirrors GraphEncoderDecoder.forward, eval mode)
# --------------------------------------------------------------------------- #
def graph_encoder_decoder_forward(params, entities, relations, x_coo,
                                  *, score_dtype=jnp.float32):
    N = entities.shape[0]
    H = params["b_gat"].shape[0]

    edge_index = x_coo[:, jnp.array([0, 2])].T             # (2, E)
    relation_index = x_coo[:, 1]                           # (E,)
    src, dst = edge_index[0], edge_index[1]

    # ----------------------- GraphEncoder (GATv2, eval) ----------------------
    # fused source/target projections: one (N,F)@(F,2H) matmul
    x_lr = pallas_matmul_bias(entities, params["w_lr"], params["b_lr"])   # (N, 2H) f32
    x_l, x_r = x_lr[:, :H], x_lr[:, H:]

    # lin_edge (F->H) and the relation-decoder projection (F->F) share the LHS:
    # merge into a single (R,F)@(F,H+F) matmul (keeps tiny matmuls to one launch).
    w_er = jnp.concatenate([params["w_e"], params["w_rel"]], axis=1)      # (F, H+F)
    b_er = jnp.concatenate([params["b_e"], params["b_rel"]], axis=0)      # (H+F,)
    rel_out = pallas_matmul_bias(relations, w_er, b_er)                   # (R, H+F) f32
    rel_proj = rel_out[:, :H]                                             # (R, H)
    relations_emb = rel_out[:, H:]                                        # (R, F)

    # TODO(synk): per-edge gathers, segment softmax and the scatter-add aggregation stay
    # as XLA glue; a PrefetchScalarGridSpec kernel over dst-sorted edges could fuse them.
    # pre-sum the three gathered operands (one fused XLA pass, one (E,H) array instead of 3)
    z = x_l[src] + x_r[dst] + rel_proj[relation_index]                    # (E, H) f32

    logits = pallas_gat_logits(z, params["att"])                          # (E,)

    # segment softmax over incoming edges of each destination node (f32 glue)
    seg_max = jax.ops.segment_max(logits, dst, num_segments=N)
    seg_max = jnp.where(jnp.isfinite(seg_max), seg_max, 0.0)
    expv = jnp.exp(logits - seg_max[dst])
    denom = jax.ops.segment_sum(expv, dst, num_segments=N)
    denom = jnp.where(denom > 0.0, denom, 1.0)
    alpha = expv / denom[dst]                                             # (E,)

    # weighted aggregation as a scatter-add (no dense (N,E) one-hot matmul)
    h_pre = jax.ops.segment_sum(alpha[:, None] * x_l[src], dst, num_segments=N)  # (N, H)

    # ELU(h_pre + b_gat) hoisted out of the matmul loops (fuses with the segment_sum output)
    act = _elu(h_pre + params["b_gat"])                                   # (N, H) f32
    entities_emb = pallas_matmul_bias(act, params["w_out"], params["b_out"])      # (N, F)

    # ----------------------- RESCAL decoder (diagonal) -----------------------
    score = pallas_rescal_diagonal(entities_emb, relations_emb,
                                   out_dtype=score_dtype)                 # (R, N, N)
    return score


# --------------------------------------------------------------------------- #
if __name__ == "__main__":
    N_ENT, N_REL, N_FEAT, H_DIM, N_EDGES = 16, 4, 32, 16, 24

    key = jax.random.PRNGKey(0)
    k1, k2, k3, k4, k5 = jax.random.split(key, 5)
    entities = jax.random.normal(k1, (N_ENT, N_FEAT), dtype=jnp.float32)
    relations = jax.random.normal(k2, (N_REL, N_FEAT), dtype=jnp.float32)
    heads = jax.random.randint(k3, (N_EDGES, 1), 0, N_ENT)
    rels = jax.random.randint(k4, (N_EDGES, 1), 0, N_REL)
    tails = jax.random.randint(k5, (N_EDGES, 1), 0, N_ENT)
    x_coo = jnp.concatenate([heads, rels, tails], axis=1).astype(jnp.int32)  # (E, 3)

    params = init_params(jax.random.PRNGKey(42), N_FEAT, H_DIM)

    fwd = jax.jit(graph_encoder_decoder_forward)
    score = fwd(params, entities, relations, x_coo)
    score = jax.block_until_ready(score)
    assert score.shape == (N_REL, N_ENT, N_ENT)
    assert score.dtype == jnp.float32
    print("KERNEL_OK")
</pallas_src>

<mosaic_0001>
module attributes {stable_mosaic.version = 11 : i64} {
  func.func private @main(%arg0: i32) attributes {dimension_semantics = [#tpu.dimension_semantics<core_parallel>], iteration_bounds = array<i64: 2>, tpu.core_type = #tpu.core_type<sc_scalar_subcore>, window_params = []} {
    return
  }
}

module attributes {stable_mosaic.version = 11 : i64} {
  func.func private @main(%arg0: i32) attributes {dimension_semantics = [#tpu.dimension_semantics<core_parallel>], iteration_bounds = array<i64: 2>, tpu.core_type = #tpu.core_type<sc_scalar_subcore>, window_params = []} {
    return
  }
}

module attributes {stable_mosaic.version = 11 : i64} {
  func.func @_mm_kernel(%arg0: i32, %arg1: i32, %arg2: i32, %arg3: memref<16x128xbf16, #tpu.memory_space<vmem>>, %arg4: memref<128x128xbf16, #tpu.memory_space<vmem>>, %arg5: memref<1x128xf32, #tpu.memory_space<vmem>>, %arg6: memref<16x128xf32, #tpu.memory_space<vmem>>) attributes {dimension_semantics = [#tpu.dimension_semantics<parallel>, #tpu.dimension_semantics<parallel>, #tpu.dimension_semantics<arbitrary>], iteration_bounds = array<i64: 1, 1, 1>, scalar_prefetch = 0 : i64, scratch_operands = 0 : i64, tpu.core_type = #tpu.core_type<tc>, window_params = [{transform_indices = @transform_0, window_bounds = array<i64: 16, 128>}, {transform_indices = @transform_1, window_bounds = array<i64: 128, 128>}, {transform_indices = @transform_2, window_bounds = array<i64: 1, 128>}, {transform_indices = @transform_3, window_bounds = array<i64: 16, 128>}]} {
    %c0_i32 = arith.constant 0 : i32
    %0 = arith.cmpi eq, %arg2, %c0_i32 : i32
    %1 = arith.extui %0 : i1 to i32
    %c0_i32_0 = arith.constant 0 : i32
    %2 = arith.cmpi ne, %1, %c0_i32_0 : i32
    scf.if %2 {
      %cst_10 = arith.constant 0.000000e+00 : f32
      %12 = vector.broadcast %cst_10 : f32 to vector<16x128xf32>
      %c0_11 = arith.constant 0 : index
      %c0_12 = arith.constant 0 : index
      %13 = vector.load %arg6[%c0_11, %c0_12] : memref<16x128xf32, #tpu.memory_space<vmem>>, vector<16x128xf32>
      tpu.vector_store %arg6[%c0_11, %c0_12], %12 {strides = array<i32>} : memref<16x128xf32, #tpu.memory_space<vmem>>, vector<16x128xf32>,
    } else {
    }
    %c0 = arith.constant 0 : index
    %c0_1 = arith.constant 0 : index
    %3 = vector.load %arg6[%c0, %c0_1] : memref<16x128xf32, #tpu.memory_space<vmem>>, vector<16x128xf32>
    %c0_2 = arith.constant 0 : index
    %c0_3 = arith.constant 0 : index
    %4 = vector.load %arg3[%c0_2, %c0_3] : memref<16x128xbf16, #tpu.memory_space<vmem>>, vector<16x128xbf16>
    %c0_4 = arith.constant 0 : index
    %c0_5 = arith.constant 0 : index
    %5 = vector.load %arg4[%c0_4, %c0_5] : memref<128x128xbf16, #tpu.memory_space<vmem>>, vector<128x128xbf16>
    %cst = arith.constant dense<0.000000e+00> : vector<16x128xf32>
    %6 = tpu.matmul %4, %5, %cst {dimension_numbers = #tpu.dot_dimension_numbers<[1], [0], [0], [1], [0, 0, 1, 1], [], []>} : vector<16x128xbf16>, vector<128x128xbf16>, vector<16x128xf32> -> vector<16x128xf32>
    %7 = arith.addf %3, %6 : vector<16x128xf32>
    %c0_6 = arith.constant 0 : index
    %c0_7 = arith.constant 0 : index
    %8 = vector.load %arg6[%c0_6, %c0_7] : memref<16x128xf32, #tpu.memory_space<vmem>>, vector<16x128xf32>
    tpu.vector_store %arg6[%c0_6, %c0_7], %7 {strides = array<i32>} : memref<16x128xf32, #tpu.memory_space<vmem>>, vector<16x128xf32>,
    %c0_i32_8 = arith.constant 0 : i32
    %9 = arith.cmpi eq, %arg2, %c0_i32_8 : i32
    %10 = arith.extui %9 : i1 to i32
    %c0_i32_9 = arith.constant 0 : i32
    %11 = arith.cmpi ne, %10, %c0_i32_9 : i32
    scf.if %11 {
      %c0_10 = arith.constant 0 : index
      %c0_11 = arith.constant 0 : index
      %12 = vector.load %arg6[%c0_10, %c0_11] : memref<16x128xf32, #tpu.memory_space<vmem>>, vector<16x128xf32>
      %c0_12 = arith.constant 0 : index
      %c0_13 = arith.constant 0 : index
      %13 = vector.load %arg5[%c0_12, %c0_13] : memref<1x128xf32, #tpu.memory_space<vmem>>, vector<1x128xf32>
      %14 = vector.broadcast %13 : vector<1x128xf32> to vector<16x128xf32>
      %15 = arith.addf %12, %14 : vector<16x128xf32>
      %c0_14 = arith.constant 0 : index
      %c0_15 = arith.constant 0 : index
      %16 = vector.load %arg6[%c0_14, %c0_15] : memref<16x128xf32, #tpu.memory_space<vmem>>, vector<16x128xf32>
      tpu.vector_store %arg6[%c0_14, %c0_15], %15 {strides = array<i32>} : memref<16x128xf32, #tpu.memory_space<vmem>>, vector<16x128xf32>,
    } else {
    }
    return
  }
  func.func @transform_0(%arg0: i32, %arg1: i32, %arg2: i32) -> (i32, i32) {
    %c0_i32 = arith.constant 0 : i32
    return %arg0, %arg2 : i32, i32
  }
  func.func @transform_1(%arg0: i32, %arg1: i32, %arg2: i32) -> (i32, i32) {
    %c0_i32 = arith.constant 0 : i32
    return %arg2, %arg1 : i32, i32
  }
  func.func @transform_2(%arg0: i32, %arg1: i32, %arg2: i32) -> (i32, i32) {
    %c0_i32 = arith.constant 0 : i32
    %c0_i32_0 = arith.constant 0 : i32
    return %c0_i32, %arg1 : i32, i32
  }
  func.func @transform_3(%arg0: i32, %arg1: i32, %arg2: i32) -> (i32, i32) {
    %c0_i32 = arith.constant 0 : i32
    return %arg0, %arg1 : i32, i32
  }
}

module attributes {stable_mosaic.version = 11 : i64} {
  func.func @_gat_logit_kernel(%arg0: i32, %arg1: memref<24x16xf32, #tpu.memory_space<vmem>>, %arg2: memref<1x16xf32, #tpu.memory_space<vmem>>, %arg3: memref<24x1xf32, #tpu.memory_space<vmem>>) attributes {dimension_semantics = [#tpu.dimension_semantics<parallel>], iteration_bounds = array<i64: 1>, scalar_prefetch = 0 : i64, scratch_operands = 0 : i64, tpu.core_type = #tpu.core_type<tc>, window_params = [{transform_indices = @transform_0, window_bounds = array<i64: 24, 16>}, {pipeline_mode = #tpu.pipeline_mode<synchronous>, transform_indices = @transform_1, window_bounds = array<i64: 1, 16>}, {transform_indices = @transform_2, window_bounds = array<i64: 24, 1>}]} {
    %c0 = arith.constant 0 : index
    %c0_0 = arith.constant 0 : index
    %0 = vector.load %arg1[%c0, %c0_0] : memref<24x16xf32, #tpu.memory_space<vmem>>, vector<24x16xf32>
    %cst = arith.constant 0.000000e+00 : f32
    %1 = vector.broadcast %cst : f32 to vector<24x16xf32>
    %2 = arith.cmpf ogt, %0, %1 : vector<24x16xf32>
    %cst_1 = arith.constant 2.000000e-01 : f32
    %3 = vector.broadcast %cst_1 : f32 to vector<24x16xf32>
    %4 = arith.mulf %3, %0 : vector<24x16xf32>
    %5 = arith.select %2, %0, %4 : vector<24x16xi1>, vector<24x16xf32>
    %c0_2 = arith.constant 0 : index
    %c0_3 = arith.constant 0 : index
    %6 = vector.load %arg2[%c0_2, %c0_3] : memref<1x16xf32, #tpu.memory_space<vmem>>, vector<1x16xf32>
    %7 = vector.broadcast %6 : vector<1x16xf32> to vector<24x16xf32>
    %8 = arith.mulf %5, %7 : vector<24x16xf32>
    %cst_4 = arith.constant dense<0.000000e+00> : vector<24xf32>
    %9 = vector.multi_reduction <add>, %8, %cst_4 [1] : vector<24x16xf32> to vector<24xf32>
    %10 = vector.shape_cast %9 : vector<24xf32> to vector<24x1xf32>
    %c0_5 = arith.constant 0 : index
    %c0_6 = arith.constant 0 : index
    %11 = vector.load %arg3[%c0_5, %c0_6] : memref<24x1xf32, #tpu.memory_space<vmem>>, vector<24x1xf32>
    tpu.vector_store %arg3[%c0_5, %c0_6], %10 {strides = array<i32>} : memref<24x1xf32, #tpu.memory_space<vmem>>, vector<24x1xf32>,
    return
  }
  func.func @transform_0(%arg0: i32) -> (i32, i32) {
    %c0_i32 = arith.constant 0 : i32
    %c0_i32_0 = arith.constant 0 : i32
    return %arg0, %c0_i32 : i32, i32
  }
  func.func @transform_1(%arg0: i32) -> (i32, i32) {
    %c0_i32 = arith.constant 0 : i32
    %c0_i32_0 = arith.constant 0 : i32
    %c0_i32_1 = arith.constant 0 : i32
    return %c0_i32, %c0_i32_0 : i32, i32
  }
  func.func @transform_2(%arg0: i32) -> (i32, i32) {
    %c0_i32 = arith.constant 0 : i32
    %c0_i32_0 = arith.constant 0 : i32
    return %arg0, %c0_i32 : i32, i32
  }
}

module attributes {stable_mosaic.version = 11 : i64} {
  func.func @_mm_kernel(%arg0: i32, %arg1: i32, %arg2: i32, %arg3: memref<8x128xbf16, #tpu.memory_space<vmem>>, %arg4: memref<128x128xbf16, #tpu.memory_space<vmem>>, %arg5: memref<1x128xf32, #tpu.memory_space<vmem>>, %arg6: memref<8x128xf32, #tpu.memory_space<vmem>>) attributes {dimension_semantics = [#tpu.dimension_semantics<parallel>, #tpu.dimension_semantics<parallel>, #tpu.dimension_semantics<arbitrary>], iteration_bounds = array<i64: 1, 1, 1>, scalar_prefetch = 0 : i64, scratch_operands = 0 : i64, tpu.core_type = #tpu.core_type<tc>, window_params = [{transform_indices = @transform_0, window_bounds = array<i64: 8, 128>}, {transform_indices = @transform_1, window_bounds = array<i64: 128, 128>}, {transform_indices = @transform_2, window_bounds = array<i64: 1, 128>}, {transform_indices = @transform_3, window_bounds = array<i64: 8, 128>}]} {
    %c0_i32 = arith.constant 0 : i32
    %0 = arith.cmpi eq, %arg2, %c0_i32 : i32
    %1 = arith.extui %0 : i1 to i32
    %c0_i32_0 = arith.constant 0 : i32
    %2 = arith.cmpi ne, %1, %c0_i32_0 : i32
    scf.if %2 {
      %cst_10 = arith.constant 0.000000e+00 : f32
      %12 = vector.broadcast %cst_10 : f32 to vector<8x128xf32>
      %c0_11 = arith.constant 0 : index
      %c0_12 = arith.constant 0 : index
      %13 = vector.load %arg6[%c0_11, %c0_12] : memref<8x128xf32, #tpu.memory_space<vmem>>, vector<8x128xf32>
      tpu.vector_store %arg6[%c0_11, %c0_12], %12 {strides = array<i32>} : memref<8x128xf32, #tpu.memory_space<vmem>>, vector<8x128xf32>,
    } else {
    }
    %c0 = arith.constant 0 : index
    %c0_1 = arith.constant 0 : index
    %3 = vector.load %arg6[%c0, %c0_1] : memref<8x128xf32, #tpu.memory_space<vmem>>, vector<8x128xf32>
    %c0_2 = arith.constant 0 : index
    %c0_3 = arith.constant 0 : index
    %4 = vector.load %arg3[%c0_2, %c0_3] : memref<8x128xbf16, #tpu.memory_space<vmem>>, vector<8x128xbf16>
    %c0_4 = arith.constant 0 : index
    %c0_5 = arith.constant 0 : index
    %5 = vector.load %arg4[%c0_4, %c0_5] : memref<128x128xbf16, #tpu.memory_space<vmem>>, vector<128x128xbf16>
    %cst = arith.constant dense<0.000000e+00> : vector<8x128xf32>
    %6 = tpu.matmul %4, %5, %cst {dimension_numbers = #tpu.dot_dimension_numbers<[1], [0], [0], [1], [0, 0, 1, 1], [], []>} : vector<8x128xbf16>, vector<128x128xbf16>, vector<8x128xf32> -> vector<8x128xf32>
    %7 = arith.addf %3, %6 : vector<8x128xf32>
    %c0_6 = arith.constant 0 : index
    %c0_7 = arith.constant 0 : index
    %8 = vector.load %arg6[%c0_6, %c0_7] : memref<8x128xf32, #tpu.memory_space<vmem>>, vector<8x128xf32>
    tpu.vector_store %arg6[%c0_6, %c0_7], %7 {strides = array<i32>} : memref<8x128xf32, #tpu.memory_space<vmem>>, vector<8x128xf32>,
    %c0_i32_8 = arith.constant 0 : i32
    %9 = arith.cmpi eq, %arg2, %c0_i32_8 : i32
    %10 = arith.extui %9 : i1 to i32
    %c0_i32_9 = arith.constant 0 : i32
    %11 = arith.cmpi ne, %10, %c0_i32_9 : i32
    scf.if %11 {
      %c0_10 = arith.constant 0 : index
      %c0_11 = arith.constant 0 : index
      %12 = vector.load %arg6[%c0_10, %c0_11] : memref<8x128xf32, #tpu.memory_space<vmem>>, vector<8x128xf32>
      %c0_12 = arith.constant 0 : index
      %c0_13 = arith.constant 0 : index
      %13 = vector.load %arg5[%c0_12, %c0_13] : memref<1x128xf32, #tpu.memory_space<vmem>>, vector<1x128xf32>
      %14 = vector.broadcast %13 : vector<1x128xf32> to vector<8x128xf32>
      %15 = arith.addf %12, %14 : vector<8x128xf32>
      %c0_14 = arith.constant 0 : index
      %c0_15 = arith.constant 0 : index
      %16 = vector.load %arg6[%c0_14, %c0_15] : memref<8x128xf32, #tpu.memory_space<vmem>>, vector<8x128xf32>
      tpu.vector_store %arg6[%c0_14, %c0_15], %15 {strides = array<i32>} : memref<8x128xf32, #tpu.memory_space<vmem>>, vector<8x128xf32>,
    } else {
    }
    return
  }
  func.func @transform_0(%arg0: i32, %arg1: i32, %arg2: i32) -> (i32, i32) {
    %c0_i32 = arith.constant 0 : i32
    return %arg0, %arg2 : i32, i32
  }
  func.func @transform_1(%arg0: i32, %arg1: i32, %arg2: i32) -> (i32, i32) {
    %c0_i32 = arith.constant 0 : i32
    return %arg2, %arg1 : i32, i32
  }
  func.func @transform_2(%arg0: i32, %arg1: i32, %arg2: i32) -> (i32, i32) {
    %c0_i32 = arith.constant 0 : i32
    %c0_i32_0 = arith.constant 0 : i32
    return %c0_i32, %arg1 : i32, i32
  }
  func.func @transform_3(%arg0: i32, %arg1: i32, %arg2: i32) -> (i32, i32) {
    %c0_i32 = arith.constant 0 : i32
    return %arg0, %arg1 : i32, i32
  }
}

module attributes {stable_mosaic.version = 11 : i64} {
  func.func @_rescal_kernel(%arg0: i32, %arg1: i32, %arg2: i32, %arg3: memref<16x32xbf16, #tpu.memory_space<vmem>>, %arg4: memref<32x16xbf16, #tpu.memory_space<vmem>>, %arg5: memref<1x1x32xf32, #tpu.memory_space<vmem>>, %arg6: memref<1x16x16xf32, #tpu.memory_space<vmem>>) attributes {dimension_semantics = [#tpu.dimension_semantics<parallel>, #tpu.dimension_semantics<parallel>, #tpu.dimension_semantics<arbitrary>], iteration_bounds = array<i64: 1, 1, 4>, scalar_prefetch = 0 : i64, scratch_operands = 0 : i64, tpu.core_type = #tpu.core_type<tc>, window_params = [{transform_indices = @transform_0, window_bounds = array<i64: 16, 32>}, {transform_indices = @transform_1, window_bounds = array<i64: 32, 16>}, {transform_indices = @transform_2, window_bounds = array<i64: 1, 1, 32>}, {transform_indices = @transform_3, window_bounds = array<i64: 1, 16, 16>}]} {
    %c0 = arith.constant 0 : index
    %c0_0 = arith.constant 0 : index
    %0 = vector.load %arg3[%c0, %c0_0] : memref<16x32xbf16, #tpu.memory_space<vmem>>, vector<16x32xbf16>
    %c0_1 = arith.constant 0 : index
    %c0_2 = arith.constant 0 : index
    %c0_3 = arith.constant 0 : index
    %1 = vector.load %arg5[%c0_1, %c0_2, %c0_3] : memref<1x1x32xf32, #tpu.memory_space<vmem>>, vector<1x1x32xf32>
    %2 = vector.shape_cast %1 : vector<1x1x32xf32> to vector<1x32xf32>
    %3 = arith.extf %0 : vector<16x32xbf16> to vector<16x32xf32>
    %4 = vector.broadcast %2 : vector<1x32xf32> to vector<16x32xf32>
    %5 = arith.mulf %3, %4 : vector<16x32xf32>
    %6 = arith.truncf %5 : vector<16x32xf32> to vector<16x32xbf16>
    %c0_4 = arith.constant 0 : index
    %c0_5 = arith.constant 0 : index
    %7 = vector.load %arg4[%c0_4, %c0_5] : memref<32x16xbf16, #tpu.memory_space<vmem>>, vector<32x16xbf16>
    %cst = arith.constant dense<0.000000e+00> : vector<16x16xf32>
    %8 = tpu.matmul %6, %7, %cst {dimension_numbers = #tpu.dot_dimension_numbers<[1], [0], [0], [1], [0, 0, 1, 1], [], []>} : vector<16x32xbf16>, vector<32x16xbf16>, vector<16x16xf32> -> vector<16x16xf32>
    %c0_6 = arith.constant 0 : index
    %c0_7 = arith.constant 0 : index
    %c0_8 = arith.constant 0 : index
    %9 = vector.load %arg6[%c0_6, %c0_7, %c0_8] : memref<1x16x16xf32, #tpu.memory_space<vmem>>, vector<1x16x16xf32>
    %10 = vector.shape_cast %9 : vector<1x16x16xf32> to vector<16x16xf32>
    %11 = vector.shape_cast %8 : vector<16x16xf32> to vector<1x16x16xf32>
    tpu.vector_store %arg6[%c0_6, %c0_7, %c0_8], %11 {strides = array<i32>} : memref<1x16x16xf32, #tpu.memory_space<vmem>>, vector<1x16x16xf32>,
    return
  }
  func.func @transform_0(%arg0: i32, %arg1: i32, %arg2: i32) -> (i32, i32) {
    %c0_i32 = arith.constant 0 : i32
    %c0_i32_0 = arith.constant 0 : i32
    return %arg0, %c0_i32 : i32, i32
  }
  func.func @transform_1(%arg0: i32, %arg1: i32, %arg2: i32) -> (i32, i32) {
    %c0_i32 = arith.constant 0 : i32
    %c0_i32_0 = arith.constant 0 : i32
    return %c0_i32, %arg1 : i32, i32
  }
  func.func @transform_2(%arg0: i32, %arg1: i32, %arg2: i32) -> (i32, i32, i32) {
    %c0_i32 = arith.constant 0 : i32
    %c0_i32_0 = arith.constant 0 : i32
    %c0_i32_1 = arith.constant 0 : i32
    return %arg2, %c0_i32, %c0_i32_0 : i32, i32, i32
  }
  func.func @transform_3(%arg0: i32, %arg1: i32, %arg2: i32) -> (i32, i32, i32) {
    %c0_i32 = arith.constant 0 : i32
    return %arg2, %arg0, %arg1 : i32, i32, i32
  }
}

</mosaic_0001>

<llo_original>
// kernel: graph_encoder_decoder_forward.7
$region0: #{graph_encoder_decoder_forward.7}
  #allocation0 [shape = 'u32[]', space=smem, size = 0x4, offset = 0x4, fixed_abs, tag = 'smem constant byte address 0x4 - core index']
  #allocation1 [shape = 'u32[144,128]{1,0:T(1,128)}', space=vmem, size = 0x12000, scoped, tag = 'internal scratch']
  %s0 = inlined_call_operand.vmem [shape: f32[24,16], index: 0, kind: input, shape index: {}]
  %s1 = inlined_call_operand.vmem [shape: f32[1,16], index: 1, kind: input, shape index: {}]
  %s2 = inlined_call_operand.vmem [shape: f32[24,1], index: 2, kind: output, shape index: {}]
  %s3 = sld [smem:[#allocation0]]
  $region18: #{graph_encoder_decoder_forward.7} parent=0
    _
  %s5 = ssub.s32 1, %s3
  %s6 = scalar_select 0, %s5, %s3
  // Predicated region
  $region2: #{graph_encoder_decoder_forward.7} parent=0 // pred_check
    _
  $region3: #{graph_encoder_decoder_forward.7} parent=0 // pred_check_branch
    %8 = sbr.rel (0) target = $region5
  $region4: #{graph_encoder_decoder_forward.7} parent=0 // pred_region
    _
  $region5: #{graph_encoder_decoder_forward.7} parent=0 // pred_fallthru
    _
  // Predicated region
  $region6: #{graph_encoder_decoder_forward.7} parent=0 // pred_check
    _
  $region7: #{graph_encoder_decoder_forward.7} parent=0 // pred_check_branch
    %10 = sbr.rel (0) target = $region9
  $region8: #{graph_encoder_decoder_forward.7} parent=0 // pred_region
    _
  $region9: #{graph_encoder_decoder_forward.7} parent=0 // pred_fallthru
    _
  %v11 = vld [vmem:[%s0] sm:$0xff]
  %v12 = vld [vmem:[%s0 + $0x8] sm:$0xff]
  %v13 = vld [vmem:[%s0 + $0x10] sm:$0xff]
  %vm14 = vcmp.gt.f32.partialorder %v11, 0.0
  %vm15 = vcmp.gt.f32.partialorder %v12, 0.0
  %vm16 = vcmp.gt.f32.partialorder %v13, 0.0
  %v17 = vmul.f32 %v11, 0.2
  %v18 = vmul.f32 %v12, 0.2
  %v19 = vmul.f32 %v13, 0.2
  %v20 = vsel %vm14, %v11, %v17
  %v21 = vsel %vm15, %v12, %v18
  %v22 = vsel %vm16, %v13, %v19
  %v23 = vld [vmem:[%s1] sm:$0x1]
  %v25 = vlaneseq
  %v26 = vshrl.u32 %v25, 7
  %v27 = vsub.s32 0, %v26
  %v28 = vrot.slane %v23, %v27
  %v30 = vmul.f32 %v20, %v28
  %v31 = vmul.f32 %v21, %v28
  %v32 = vmul.f32 %v22, %v28
  %vm33 = vcmask 130048
  %v34 = vsel %vm33, %v30, 0.0
  %35 = vadd.xlane.f32.xlu0 %v34
  %v36 = vpop.xlane.xlu0 %35
  %v37 = vsel %vm33, %v31, 0.0
  %38 = vadd.xlane.f32.xlu0 %v37
  %v39 = vpop.xlane.xlu0 %38
  %v40 = vsel %vm33, %v32, 0.0
  %41 = vadd.xlane.f32.xlu0 %v40
  %v42 = vpop.xlane.xlu0 %41
  %vm43 = vcmask 7168
  %44 = vst.msk [vmem:[%s2] sm:$0xff] %vm43, %v36
  %45 = vst.msk [vmem:[%s2 + $0x8] sm:$0xff] %vm43, %v39
  %46 = vst.msk [vmem:[%s2 + $0x10] sm:$0xff] %vm43, %v42
  // Predicated region
  $region10: #{graph_encoder_decoder_forward.7} parent=0 // pred_check
    _
  $region11: #{graph_encoder_decoder_forward.7} parent=0 // pred_check_branch
    %48 = sbr.rel (0) target = $region13
  $region12: #{graph_encoder_decoder_forward.7} parent=0 // pred_region
    _
  $region13: #{graph_encoder_decoder_forward.7} parent=0 // pred_fallthru
    _
  // Predicated region
  $region14: #{graph_encoder_decoder_forward.7} parent=0 // pred_check
    _
  $region15: #{graph_encoder_decoder_forward.7} parent=0 // pred_check_branch
    %50 = sbr.rel (0) target = $region17
  $region16: #{graph_encoder_decoder_forward.7} parent=0 // pred_region
    _
  $region17: #{graph_encoder_decoder_forward.7} parent=0 // pred_fallthru
    _

// kernel: graph_encoder_decoder_forward.5
$region0: #{graph_encoder_decoder_forward.5}
  #allocation0 [shape = 'u32[]', space=smem, size = 0x4, offset = 0x4, fixed_abs, tag = 'smem constant byte address 0x4 - core index']
  #allocation1 [shape = 'u32[144,128]{1,0:T(1,128)}', space=vmem, size = 0x12000, scoped, tag = 'internal scratch']
  %s0 = inlined_call_operand.vmem [shape: bf16[16,128], index: 0, kind: input, shape index: {}]
  %s1 = inlined_call_operand.vmem [shape: bf16[128,128], index: 1, kind: input, shape index: {}]
  %s2 = inlined_call_operand.vmem [shape: f32[1,128], index: 2, kind: input, shape index: {}]
  %s3 = inlined_call_operand.vmem [shape: f32[16,32], index: 3, kind: output, shape index: {}]
  %s4 = sld [smem:[#allocation0]]
  $region30: #{graph_encoder_decoder_forward.5} parent=0
    _
  %s6 = ssub.s32 1, %s4
  %s7 = scalar_select 0, %s6, %s4
  // Predicated region
  $region2: #{graph_encoder_decoder_forward.5} parent=0 // pred_check
    _
  $region3: #{graph_encoder_decoder_forward.5} parent=0 // pred_check_branch
    %9 = sbr.rel (0) target = $region5
  $region4: #{graph_encoder_decoder_forward.5} parent=0 // pred_region
    _
  $region5: #{graph_encoder_decoder_forward.5} parent=0 // pred_fallthru
    _
  // Predicated region
  $region6: #{graph_encoder_decoder_forward.5} parent=0 // pred_check
    _
  $region7: #{graph_encoder_decoder_forward.5} parent=0 // pred_check_branch
    %11 = sbr.rel (0) target = $region9
  $region8: #{graph_encoder_decoder_forward.5} parent=0 // pred_region
    _
  $region9: #{graph_encoder_decoder_forward.5} parent=0 // pred_fallthru
    _
  // Predicated region
  $region10: #{graph_encoder_decoder_forward.5} parent=0 // pred_check
    _
  $region11: #{graph_encoder_decoder_forward.5} parent=0 // pred_check_branch
    %13 = sbr.rel (0) target = $region13
  $region12: #{graph_encoder_decoder_forward.5} parent=0 // pred_region
    _
  $region13: #{graph_encoder_decoder_forward.5} parent=0 // pred_fallthru
    _
  %p15 = scmp.eq.s32.totalorder 0, 0
  // Predicated region
  $region14: #{graph_encoder_decoder_forward.5} parent=0 // pred_check
    %p16 = pneg %p15
  $region15: #{graph_encoder_decoder_forward.5} parent=0 // pred_check_branch
    %18 = sbr.rel (%p16) target = $region17
  $region16: #{graph_encoder_decoder_forward.5} parent=0 // pred_region
    %19 = vst [vmem:[%s3] sm:$0xff] 0.0
    %20 = vst [vmem:[%s3 + $0x8] sm:$0xff] 0.0
  $region17: #{graph_encoder_decoder_forward.5} parent=0 // pred_fallthru
    _
  %v21 = vld [vmem:[%s3] sm:$0xff]
  %v22 = vld [vmem:[%s3 + $0x8] sm:$0xff]
  %v23 = vld [vmem:[%s0] sm:$0xf]
  %v24 = vld [vmem:[%s0 + $0x4] sm:$0xf]
  %v25 = vld [vmem:[%s1] sm:$0xf]
  %v26 = vld [vmem:[%s1 + $0x4] sm:$0xf]
  %v27 = vld [vmem:[%s1 + $0x8] sm:$0xf]
  %v28 = vld [vmem:[%s1 + $0xc] sm:$0xf]
  %v29 = vld [vmem:[%s1 + $0x10] sm:$0xf]
  %v30 = vld [vmem:[%s1 + $0x14] sm:$0xf]
  %v31 = vld [vmem:[%s1 + $0x18] sm:$0xf]
  %v32 = vld [vmem:[%s1 + $0x1c] sm:$0xf]
  %v33 = vld [vmem:[%s1 + $0x20] sm:$0xf]
  %v34 = vld [vmem:[%s1 + $0x24] sm:$0xf]
  %v35 = vld [vmem:[%s1 + $0x28] sm:$0xf]
  %v36 = vld [vmem:[%s1 + $0x2c] sm:$0xf]
  %v37 = vld [vmem:[%s1 + $0x30] sm:$0xf]
  %v38 = vld [vmem:[%s1 + $0x34] sm:$0xf]
  %v39 = vld [vmem:[%s1 + $0x38] sm:$0xf]
  %v40 = vld [vmem:[%s1 + $0x3c] sm:$0xf]
  %v43 = vunpack.c.l.b16 %v23
  %v44 = vunpack.c.l.b16 %v24
  %v45 = vpack.c.b16 %v44, %v43
  %v63 = vunpack.c.l.b16 %v25
  %v64 = vunpack.c.l.b16 %v26
  %v65 = vunpack.c.l.b16 %v27
  %v66 = vunpack.c.l.b16 %v28
  %v67 = vunpack.c.l.b16 %v29
  %v68 = vunpack.c.l.b16 %v30
  %v69 = vunpack.c.l.b16 %v31
  %v70 = vunpack.c.l.b16 %v32
  %v71 = vunpack.c.l.b16 %v33
  %v72 = vunpack.c.l.b16 %v34
  %v73 = vunpack.c.l.b16 %v35
  %v74 = vunpack.c.l.b16 %v36
  %v75 = vunpack.c.l.b16 %v37
  %v76 = vunpack.c.l.b16 %v38
  %v77 = vunpack.c.l.b16 %v39
  %v78 = vunpack.c.l.b16 %v40
  %v79 = vpack.c.b16 %v64, %v63
  %v80 = vpack.c.b16 %v66, %v65
  %v81 = vpack.c.b16 %v68, %v67
  %v82 = vpack.c.b16 %v70, %v69
  %v83 = vpack.c.b16 %v72, %v71
  %v84 = vpack.c.b16 %v74, %v73
  %v85 = vpack.c.b16 %v76, %v75
  %v86 = vpack.c.b16 %v78, %v77
  %95 = vmatprep.subr.bf16.mxu0 0
  %96 = vmatpush1.bf16.msra.mxu0 %v86
  %97 = vmatprep.subr.bf16.mxu0 0
  %98 = vmatpush1.bf16.msra.mxu0 %v85
  %99 = vmatprep.subr.bf16.mxu0 0
  %100 = vmatpush1.bf16.msra.mxu0 %v84
  %101 = vmatprep.subr.bf16.mxu0 0
  %102 = vmatpush1.bf16.msra.mxu0 %v83
  %103 = vmatprep.subr.bf16.mxu0 0
  %104 = vmatpush1.bf16.msra.mxu0 %v82
  %105 = vmatprep.subr.bf16.mxu0 0
  %106 = vmatpush1.bf16.msra.mxu0 %v81
  %107 = vmatprep.subr.bf16.mxu0 0
  %108 = vmatpush1.bf16.msra.mxu0 %v80
  %109 = vmatprep.subr.bf16.mxu0 0
  %110 = vmatpush1.bf16.msra.mxu0 %v79
  %111 = vmatprep.subr.bf16.mxu0 0
  %112 = vmatpush2.bf16.msra.mxu0 0
  %113 = vmatprep.subr.bf16.mxu0 0
  %114 = vmatpush2.bf16.msra.mxu0 0
  %115 = vmatprep.subr.bf16.mxu0 0
  %116 = vmatpush2.bf16.msra.mxu0 0
  %117 = vmatprep.subr.bf16.mxu0 0
  %118 = vmatpush2.bf16.msra.mxu0 0
  %119 = vmatprep.subr.bf16.mxu0 0
  %120 = vmatpush2.bf16.msra.mxu0 0
  %121 = vmatprep.subr.bf16.mxu0 0
  %122 = vmatpush2.bf16.msra.mxu0 0
  %123 = vmatprep.subr.bf16.mxu0 0
  %124 = vmatpush2.bf16.msra.mxu0 0
  %125 = vmatprep.subr.bf16.mxu0 0
  %126 = vmatpush2.bf16.msra.mxu0 0
  %127 = vmatprep.mubr.bf16.mxu0 0
  %128 = vmatmul.mubr.bf16.gmra.mxu0 %v45
  %v129 = vpop.f32.mrf.mxu0
  %v130 = vadd.f32 0.0, %v129
  %v131 = vpop.f32.mrf.mxu0
  %v132 = vpop.f32.mrf.mxu0
  %v133 = vadd.f32 0.0, %v132
  %v134 = vpop.f32.mrf.mxu0
  %135 = vdwg.mxu0
  %v136 = vadd.f32 %v21, %v130
  %v137 = vadd.f32 %v22, %v133
  %138 = vst [vmem:[%s3] sm:$0xff] %v136
  %139 = vst [vmem:[%s3 + $0x8] sm:$0xff] %v137
  // Predicated region
  $region18: #{graph_encoder_decoder_forward.5} parent=0 // pred_check
    %p140 = pneg %p15
  $region19: #{graph_encoder_decoder_forward.5} parent=0 // pred_check_branch
    %142 = sbr.rel (%p140) target = $region21
  $region20: #{graph_encoder_decoder_forward.5} parent=0 // pred_region
    %v143 = vld [vmem:[%s3] sm:$0xff]
    %v144 = vld [vmem:[%s3 + $0x8] sm:$0xff]
    %v145 = vld [vmem:[%s2] sm:$0x1]
    %v147 = vlaneseq
    %v148 = vshrl.u32 %v147, 7
    %v149 = vsub.s32 0, %v148
    %v150 = vrot.slane %v145, %v149
    %v152 = vadd.f32 %v143, %v150
    %v153 = vadd.f32 %v144, %v150
    %154 = vst [vmem:[%s3] sm:$0xff] %v152
    %155 = vst [vmem:[%s3 + $0x8] sm:$0xff] %v153
  $region21: #{graph_encoder_decoder_forward.5} parent=0 // pred_fallthru
    _
  // Predicated region
  $region22: #{graph_encoder_decoder_forward.5} parent=0 // pred_check
    _
  $region23: #{graph_encoder_decoder_forward.5} parent=0 // pred_check_branch
    %157 = sbr.rel (0) target = $region25
  $region24: #{graph_encoder_decoder_forward.5} parent=0 // pred_region
    _
  $region25: #{graph_encoder_decoder_forward.5} parent=0 // pred_fallthru
    _
  // Predicated region
  $region26: #{graph_encoder_decoder_forward.5} parent=0 // pred_check
    _
  $region27: #{graph_encoder_decoder_forward.5} parent=0 // pred_check_branch
    %159 = sbr.rel (0) target = $region29
  $region28: #{graph_encoder_decoder_forward.5} parent=0 // pred_region
    _
  $region29: #{graph_encoder_decoder_forward.5} parent=0 // pred_fallthru
    _

// kernel: graph_encoder_decoder_forward.6
$region0: #{graph_encoder_decoder_forward.6}
  #allocation0 [shape = 'u32[]', space=smem, size = 0x4, offset = 0x4, fixed_abs, tag = 'smem constant byte address 0x4 - core index']
  #allocation1 [shape = 'u32[144,128]{1,0:T(1,128)}', space=vmem, size = 0x12000, scoped, tag = 'internal scratch']
  %s0 = inlined_call_operand.vmem [shape: bf16[4,128], index: 0, kind: input, shape index: {}]
  %s1 = inlined_call_operand.vmem [shape: bf16[128,128], index: 1, kind: input, shape index: {}]
  %s2 = inlined_call_operand.vmem [shape: f32[1,128], index: 2, kind: input, shape index: {}]
  %s3 = inlined_call_operand.vmem [shape: f32[4,48], index: 3, kind: output, shape index: {}]
  %s4 = sld [smem:[#allocation0]]
  $region60: #{graph_encoder_decoder_forward.6} parent=0
    _
  %s6 = ssub.s32 1, %s4
  %s7 = scalar_select 0, %s6, %s4
  $region1: #{graph_encoder_decoder_forward.6} parent=0
    #allocation2 [shape = 'u8[4096]{0}', space=vmem, size = 0x1000, scoped, tag = 'output window, operand 0, single buffered']
    // Predicated region
    $region2: #{graph_encoder_decoder_forward.6} parent=1 // pred_check
      _
    $region3: #{graph_encoder_decoder_forward.6} parent=1 // pred_check_branch
      %9 = sbr.rel (0) target = $region5
    $region4: #{graph_encoder_decoder_forward.6} parent=1 // pred_region
      _
    $region5: #{graph_encoder_decoder_forward.6} parent=1 // pred_fallthru
      _
    // Predicated region
    $region6: #{graph_encoder_decoder_forward.6} parent=1 // pred_check
      _
    $region7: #{graph_encoder_decoder_forward.6} parent=1 // pred_check_branch
      %11 = sbr.rel (0) target = $region9
    $region8: #{graph_encoder_decoder_forward.6} parent=1 // pred_region
      _
    $region9: #{graph_encoder_decoder_forward.6} parent=1 // pred_fallthru
      _
    // Predicated region
    $region10: #{graph_encoder_decoder_forward.6} parent=1 // pred_check
      _
    $region11: #{graph_encoder_decoder_forward.6} parent=1 // pred_check_branch
      %13 = sbr.rel (0) target = $region13
    $region12: #{graph_encoder_decoder_forward.6} parent=1 // pred_region
      _
    $region13: #{graph_encoder_decoder_forward.6} parent=1 // pred_fallthru
      _
    %p15 = scmp.eq.s32.totalorder 0, 0
    // Predicated region
    $region14: #{graph_encoder_decoder_forward.6} parent=1 // pred_check
      %p16 = pneg %p15
    $region15: #{graph_encoder_decoder_forward.6} parent=1 // pred_check_branch
      %18 = sbr.rel (%p16) target = $region17
    $region16: #{graph_encoder_decoder_forward.6} parent=1 // pred_region
      %19 = vst [vmem:[#allocation2] sm:$0xff] 0.0
    $region17: #{graph_encoder_decoder_forward.6} parent=1 // pred_fallthru
      _
    %v20 = vld [vmem:[#allocation2] sm:$0xff]
    %v21 = vld [vmem:[%s0] sm:$0x3]
    %v22 = vld [vmem:[%s0 + $0x2] sm:$0x3]
    %v23 = vld [vmem:[%s1] sm:$0xf]
    %v24 = vld [vmem:[%s1 + $0x4] sm:$0xf]
    %v25 = vld [vmem:[%s1 + $0x8] sm:$0xf]
    %v26 = vld [vmem:[%s1 + $0xc] sm:$0xf]
    %v27 = vld [vmem:[%s1 + $0x10] sm:$0xf]
    %v28 = vld [vmem:[%s1 + $0x14] sm:$0xf]
    %v29 = vld [vmem:[%s1 + $0x18] sm:$0xf]
    %v30 = vld [vmem:[%s1 + $0x1c] sm:$0xf]
    %v31 = vld [vmem:[%s1 + $0x20] sm:$0xf]
    %v32 = vld [vmem:[%s1 + $0x24] sm:$0xf]
    %v33 = vld [vmem:[%s1 + $0x28] sm:$0xf]
    %v34 = vld [vmem:[%s1 + $0x2c] sm:$0xf]
    %v35 = vld [vmem:[%s1 + $0x30] sm:$0xf]
    %v36 = vld [vmem:[%s1 + $0x34] sm:$0xf]
    %v37 = vld [vmem:[%s1 + $0x38] sm:$0xf]
    %v38 = vld [vmem:[%s1 + $0x3c] sm:$0xf]
    %v41 = vcombine.low %v21, %v22
    %v43 = vunpack.c.l.s4 1983009808
    %v44 = vunpack.c.0.s8 %v43
    %v45 = vlaneseq
    %v46 = vshrl.u32 %v45, 7
    %v47 = vsub.s32 %v44, %v46
    %v48 = vrot.slane %v41, %v47
    %v66 = vunpack.c.l.b16 %v23
    %v67 = vunpack.c.l.b16 %v24
    %v68 = vunpack.c.l.b16 %v25
    %v69 = vunpack.c.l.b16 %v26
    %v70 = vunpack.c.l.b16 %v27
    %v71 = vunpack.c.l.b16 %v28
    %v72 = vunpack.c.l.b16 %v29
    %v73 = vunpack.c.l.b16 %v30
    %v74 = vunpack.c.l.b16 %v31
    %v75 = vunpack.c.l.b16 %v32
    %v76 = vunpack.c.l.b16 %v33
    %v77 = vunpack.c.l.b16 %v34
    %v78 = vunpack.c.l.b16 %v35
    %v79 = vunpack.c.l.b16 %v36
    %v80 = vunpack.c.l.b16 %v37
    %v81 = vunpack.c.l.b16 %v38
    %v82 = vpack.c.b16 %v67, %v66
    %v83 = vpack.c.b16 %v69, %v68
    %v84 = vpack.c.b16 %v71, %v70
    %v85 = vpack.c.b16 %v73, %v72
    %v86 = vpack.c.b16 %v75, %v74
    %v87 = vpack.c.b16 %v77, %v76
    %v88 = vpack.c.b16 %v79, %v78
    %v89 = vpack.c.b16 %v81, %v80
    %98 = vmatprep.subr.bf16.mxu0 0
    %99 = vmatpush1.bf16.msra.mxu0 %v89
    %100 = vmatprep.subr.bf16.mxu0 0
    %101 = vmatpush1.bf16.msra.mxu0 %v88
    %102 = vmatprep.subr.bf16.mxu0 0
    %103 = vmatpush1.bf16.msra.mxu0 %v87
    %104 = vmatprep.subr.bf16.mxu0 0
    %105 = vmatpush1.bf16.msra.mxu0 %v86
    %106 = vmatprep.subr.bf16.mxu0 0
    %107 = vmatpush1.bf16.msra.mxu0 %v85
    %108 = vmatprep.subr.bf16.mxu0 0
    %109 = vmatpush1.bf16.msra.mxu0 %v84
    %110 = vmatprep.subr.bf16.mxu0 0
    %111 = vmatpush1.bf16.msra.mxu0 %v83
    %112 = vmatprep.subr.bf16.mxu0 0
    %113 = vmatpush1.bf16.msra.mxu0 %v82
    %114 = vmatprep.subr.bf16.mxu0 0
    %115 = vmatpush2.bf16.msra.mxu0 0
    %116 = vmatprep.subr.bf16.mxu0 0
    %117 = vmatpush2.bf16.msra.mxu0 0
    %118 = vmatprep.subr.bf16.mxu0 0
    %119 = vmatpush2.bf16.msra.mxu0 0
    %120 = vmatprep.subr.bf16.mxu0 0
    %121 = vmatpush2.bf16.msra.mxu0 0
    %122 = vmatprep.subr.bf16.mxu0 0
    %123 = vmatpush2.bf16.msra.mxu0 0
    %124 = vmatprep.subr.bf16.mxu0 0
    %125 = vmatpush2.bf16.msra.mxu0 0
    %126 = vmatprep.subr.bf16.mxu0 0
    %127 = vmatpush2.bf16.msra.mxu0 0
    %128 = vmatprep.subr.bf16.mxu0 0
    %129 = vmatpush2.bf16.msra.mxu0 0
    %130 = vmatprep.mubr.bf16.mxu0 0
    %131 = vmatmul.mubr.bf16.gmra.mxu0 %v48
    %v132 = vpop.f32.mrf.mxu0
    %v133 = vadd.f32 0.0, %v132
    %v134 = vpop.f32.mrf.mxu0
    %v135 = vpop.f32.mrf.mxu0
    %v136 = vpop.f32.mrf.mxu0
    %137 = vdwg.mxu0
    %v138 = vadd.f32 %v20, %v133
    %139 = vst [vmem:[#allocation2] sm:$0xff] %v138
    // Predicated region
    $region18: #{graph_encoder_decoder_forward.6} parent=1 // pred_check
      %p140 = pneg %p15
    $region19: #{graph_encoder_decoder_forward.6} parent=1 // pred_check_branch
      %142 = sbr.rel (%p140) target = $region21
    $region20: #{graph_encoder_decoder_forward.6} parent=1 // pred_region
      %v143 = vld [vmem:[#allocation2] sm:$0xff]
      %v144 = vld [vmem:[%s2] sm:$0x1]
      %v146 = vlaneseq
      %v147 = vshrl.u32 %v146, 7
      %v148 = vsub.s32 0, %v147
      %v149 = vrot.slane %v144, %v148
      %v151 = vadd.f32 %v143, %v149
      %152 = vst [vmem:[#allocation2] sm:$0xff] %v151
    $region21: #{graph_encoder_decoder_forward.6} parent=1 // pred_fallthru
      _
    // Predicated region
    $region22: #{graph_encoder_decoder_forward.6} parent=1 // pred_check
      _
    $region23: #{graph_encoder_decoder_forward.6} parent=1 // pred_check_branch
      %154 = sbr.rel (0) target = $region25
    $region24: #{graph_encoder_decoder_forward.6} parent=1 // pred_region
      // Predicated region
      $region26: #{graph_encoder_decoder_forward.6} parent=24 // pred_check
        _
      $region27: #{graph_encoder_decoder_forward.6} parent=24 // pred_check_branch
        %156 = sbr.rel (0) target = $region29
      $region28: #{graph_encoder_decoder_forward.6} parent=24 // pred_region
        // Predicated region
        $region30: #{graph_encoder_decoder_forward.6} parent=28 // pred_check
          _
        $region31: #{graph_encoder_decoder_forward.6} parent=28 // pred_check_branch
          %158 = sbr.rel target = $region33
        $region32: #{graph_encoder_decoder_forward.6} parent=28 // pred_region
          // Predicated region
          $region45: #{graph_encoder_decoder_forward.6} parent=32 // pred_check
            _
          $region46: #{graph_encoder_decoder_forward.6} parent=32 // pred_check_branch
            %174 = sbr.rel (0) target = $region48
          $region47: #{graph_encoder_decoder_forward.6} parent=32 // pred_region
            %s176 = ssub.s32 16, 1
            loop: start=0, step=1, limit=1
            $region49: #{graph_encoder_decoder_forward.6} parent=47 // loop_pre_header
              _
            $region50: #{graph_encoder_decoder_forward.6} parent=47 // loop_header
              %s178 = sphi 0, %s182
              %p179 = scmp.ge.s32.totalorder %s178, 1
              %s183 = sphi [#allocation2], [#allocation2]
              %s184 = sphi %s3, %s3
            $region51: #{graph_encoder_decoder_forward.6} parent=47 // loop_header_branch
              %181 = sbr.rel (%p179) target = $region55
            $region52: #{graph_encoder_decoder_forward.6} parent=47 // loop_body
              %v185 = vld [vmem:[%s183] sm:%s176]
              %186 = vst [vmem:[%s184] sm:%s176] %v185
            $region53: #{graph_encoder_decoder_forward.6} parent=47 // loop_footer
              %s182 = sadd.s32 1, %s178
            $region54: #{graph_encoder_decoder_forward.6} parent=47 // loop_footer_branch
              %177 = sbr.rel target = $region50
            $region55: #{graph_encoder_decoder_forward.6} parent=47 // loop_exit
              _
          $region48: #{graph_encoder_decoder_forward.6} parent=32 // pred_fallthru
            _
        $region33: #{graph_encoder_decoder_forward.6} parent=28 // pred_fallthru
          _
        // Predicated region
        $region34: #{graph_encoder_decoder_forward.6} parent=28 // pred_check
          _
        $region35: #{graph_encoder_decoder_forward.6} parent=28 // pred_check_branch
          %160 = sbr.rel (0) target = $region37
        $region36: #{graph_encoder_decoder_forward.6} parent=28 // pred_region
          %s162 = ssub.s32 16, 1
          loop: start=0, step=1, limit=1
          $region38: #{graph_encoder_decoder_forward.6} parent=36 // loop_pre_header
            _
          $region39: #{graph_encoder_decoder_forward.6} parent=36 // loop_header
            %s164 = sphi 0, %s168
            %p165 = scmp.ge.s32.totalorder %s164, 1
            %s169 = sphi [#allocation2], [#allocation2]
            %s170 = sphi %s3, %s3
          $region40: #{graph_encoder_decoder_forward.6} parent=36 // loop_header_branch
            %167 = sbr.rel (%p165) target = $region44
          $region41: #{graph_encoder_decoder_forward.6} parent=36 // loop_body
            %v171 = vld [vmem:[%s169] sm:%s162]
            %172 = vst [vmem:[%s170] sm:%s162] %v171
          $region42: #{graph_encoder_decoder_forward.6} parent=36 // loop_footer
            %s168 = sadd.s32 1, %s164
          $region43: #{graph_encoder_decoder_forward.6} parent=36 // loop_footer_branch
            %163 = sbr.rel target = $region39
          $region44: #{graph_encoder_decoder_forward.6} parent=36 // loop_exit
            _
        $region37: #{graph_encoder_decoder_forward.6} parent=28 // pred_fallthru
          _
      $region29: #{graph_encoder_decoder_forward.6} parent=24 // pred_fallthru
        _
      %187 = vnop
    $region25: #{graph_encoder_decoder_forward.6} parent=1 // pred_fallthru
      _
    // Predicated region
    $region56: #{graph_encoder_decoder_forward.6} parent=1 // pred_check
      _
    $region57: #{graph_encoder_decoder_forward.6} parent=1 // pred_check_branch
      %189 = sbr.rel (0) target = $region59
    $region58: #{graph_encoder_decoder_forward.6} parent=1 // pred_region
      _
    $region59: #{graph_encoder_decoder_forward.6} parent=1 // pred_fallthru
      _

// kernel: graph_encoder_decoder_forward.9
$region0: #{graph_encoder_decoder_forward.9}
  #allocation0 [shape = 'u32[]', space=smem, size = 0x4, offset = 0x4, fixed_abs, tag = 'smem constant byte address 0x4 - core index']
  #allocation1 [shape = 'u32[144,128]{1,0:T(1,128)}', space=vmem, size = 0x12000, scoped, tag = 'internal scratch']
  %s0 = inlined_call_operand.vmem [shape: bf16[16,32], index: 0, kind: input, shape index: {}]
  %s1 = inlined_call_operand.vmem [shape: bf16[32,16], index: 1, kind: input, shape index: {}]
  %s2 = inlined_call_operand.vmem [shape: f32[4,1,32], index: 2, kind: input, shape index: {}]
  %s3 = inlined_call_operand.hbm [shape: f32[4,16,16], index: 3, kind: output, shape index: {}]
  %s4 = sld [smem:[#allocation0]]
  $region45: #{graph_encoder_decoder_forward.9} parent=0
    _
  %s6 = ssub.s32 1, %s4
  %s7 = scalar_select 0, %s6, %s4
  $region1: #{graph_encoder_decoder_forward.9} parent=0
    #allocation2 [shape = 'u8[16384]{0}', space=vmem, size = 0x4000, scoped, tag = 'output window, operand 0']
    #allocation3 [shape = 's32[2]{0}', space=sflag, size = 0x8, scoped, tag = 'scoped memory for graph_encoder_decoder_forward.9']
    %8 = vsyncpa [#allocation3], 0
    %s9 = scalar_lea.sflag [#allocation3], 1
    %10 = vsyncpa %s9, 0
    loop: start=0, step=1, limit=6
    $region2: #{graph_encoder_decoder_forward.9} parent=1 // loop_pre_header
      _
    $region3: #{graph_encoder_decoder_forward.9} parent=1 // loop_header
      %s12 = sphi 0, %s16
      %p13 = scmp.ge.s32.totalorder %s12, 6
      %s19 = sphi 0, %s38
      %s20 = sphi 0, %s34
      %s21 = sphi 0, %s30
      %s22 = sphi 0, %s19
      %s23 = sphi 0, %s20
      %s24 = sphi 0, %s21
      %s25 = sphi 0, %s22
      %s26 = sphi 0, %s23
      %s27 = sphi 0, %s24
      %s41 = sphi 0, %s43
      %s44 = sphi 0, %s41
      %s45 = sphi 0, %s44
      %s61 = sphi 0, %s45
      %s67 = sphi 0, %s69
      %s70 = sphi 0, %s67
      %s71 = sphi 0, %s70
      %s87 = sphi 0, %s71
      %s93 = sphi 0, %s95
      %s96 = sphi 0, %s93
      %s97 = sphi 0, %s96
      %s113 = sphi 0, %s97
      %s123 = sphi 0, %s125
      %s126 = sphi 0, %s123
      %s127 = sphi 0, %s126
      %s143 = sphi 0, %s127
    $region4: #{graph_encoder_decoder_forward.9} parent=1 // loop_header_branch
      %15 = sbr.rel (%p13) target = $region8
    $region5: #{graph_encoder_decoder_forward.9} parent=1 // loop_body
      %s17 = ssub.s32 %s12, 1
      %s18 = ssub.s32 %s12, 2
      %s28 = sadd.s32 1, %s21
      %p29 = scmp.ge.s32.totalorder %s28, 4
      %s30 = scalar_select %p29, 0, %s28
      %s31 = sadd.s32 1, %s20
      %s32 = scalar_select %p29, %s31, %s20
      %p33 = scmp.ge.s32.totalorder %s32, 1
      %s34 = scalar_select %p33, 0, %s32
      %s35 = sadd.s32 1, %s19
      %s36 = scalar_select %p33, %s35, %s19
      %p37 = scmp.ge.s32.totalorder %s36, 1
      %s38 = scalar_select %p37, 0, %s36
      %s39 = ssub.s32 %s19, %s38
      %p40 = scmp.eq.s32.totalorder %s39, 0
      %s42 = sadd.s32 %s41, 1
      %s43 = scalar_select %p40, %s41, %s42
      %p46 = pneg %p40
      %p47 = scmp.eq.s32.totalorder %s12, 3
      %p48 = por %p46, %p47
      %p49 = scmp.ne.s32.totalorder %s41, %s44
      %p50 = scmp.eq.s32.totalorder %s12, 0
      %p51 = por %p49, %p50
      %p52 = scmp.ne.s32.totalorder %s41, %s44
      %p53 = scmp.eq.s32.totalorder %s17, 3
      %p54 = por %p52, %p53
      %p55 = scmp.ne.s32.totalorder %s44, %s45
      %p56 = scmp.eq.s32.totalorder %s17, 0
      %p57 = por %p55, %p56
      %p58 = scmp.ne.s32.totalorder %s44, %s45
      %p59 = scmp.eq.s32.totalorder %s18, 3
      %p60 = por %p58, %p59
      %p62 = scmp.ne.s32.totalorder %s45, %s61
      %p63 = scmp.eq.s32.totalorder %s18, 0
      %p64 = por %p62, %p63
      %s65 = ssub.s32 %s20, %s34
      %p66 = scmp.eq.s32.totalorder %s65, 0
      %s68 = sadd.s32 %s67, 1
      %s69 = scalar_select %p66, %s67, %s68
      %p72 = pneg %p66
      %p73 = scmp.eq.s32.totalorder %s12, 3
      %p74 = por %p72, %p73
      %p75 = scmp.ne.s32.totalorder %s67, %s70
      %p76 = scmp.eq.s32.totalorder %s12, 0
      %p77 = por %p75, %p76
      %p78 = scmp.ne.s32.totalorder %s67, %s70
      %p79 = scmp.eq.s32.totalorder %s17, 3
      %p80 = por %p78, %p79
      %p81 = scmp.ne.s32.totalorder %s70, %s71
      %p82 = scmp.eq.s32.totalorder %s17, 0
      %p83 = por %p81, %p82
      %p84 = scmp.ne.s32.totalorder %s70, %s71
      %p85 = scmp.eq.s32.totalorder %s18, 3
      %p86 = por %p84, %p85
      %p88 = scmp.ne.s32.totalorder %s71, %s87
      %p89 = scmp.eq.s32.totalorder %s18, 0
      %p90 = por %p88, %p89
      %s91 = ssub.s32 %s21, %s30
      %p92 = scmp.eq.s32.totalorder %s91, 0
      %s94 = sadd.s32 %s93, 1
      %s95 = scalar_select %p92, %s93, %s94
      %p98 = pneg %p92
      %p99 = scmp.eq.s32.totalorder %s12, 3
      %p100 = por %p98, %p99
      %p101 = scmp.ne.s32.totalorder %s93, %s96
      %p102 = scmp.eq.s32.totalorder %s12, 0
      %p103 = por %p101, %p102
      %p104 = scmp.ne.s32.totalorder %s93, %s96
      %p105 = scmp.eq.s32.totalorder %s17, 3
      %p106 = por %p104, %p105
      %p107 = scmp.ne.s32.totalorder %s96, %s97
      %p108 = scmp.eq.s32.totalorder %s17, 0
      %p109 = por %p107, %p108
      %p110 = scmp.ne.s32.totalorder %s96, %s97
      %p111 = scmp.eq.s32.totalorder %s18, 3
      %p112 = por %p110, %p111
      %p114 = scmp.ne.s32.totalorder %s97, %s113
      %p115 = scmp.eq.s32.totalorder %s18, 0
      %p116 = por %p114, %p115
      %s117 = ssub.s32 %s21, %s30
      %s118 = ssub.s32 %s19, %s38
      %s119 = sor.u32 %s117, %s118
      %s120 = ssub.s32 %s20, %s34
      %s121 = sor.u32 %s119, %s120
      %p122 = scmp.eq.s32.totalorder %s121, 0
      %s124 = sadd.s32 %s123, 1
      %s125 = scalar_select %p122, %s123, %s124
      %p128 = pneg %p122
      %p129 = scmp.eq.s32.totalorder %s12, 3
      %p130 = por %p128, %p129
      %p131 = scmp.ne.s32.totalorder %s123, %s126
      %p132 = scmp.eq.s32.totalorder %s12, 0
      %p133 = por %p131, %p132
      %p134 = scmp.ne.s32.totalorder %s123, %s126
      %p135 = scmp.eq.s32.totalorder %s17, 3
      %p136 = por %p134, %p135
      %p137 = scmp.ne.s32.totalorder %s126, %s127
      %p138 = scmp.eq.s32.totalorder %s17, 0
      %p139 = por %p137, %p138
      %p140 = scmp.ne.s32.totalorder %s126, %s127
      %p141 = scmp.eq.s32.totalorder %s18, 3
      %p142 = por %p140, %p141
      %p144 = scmp.ne.s32.totalorder %s127, %s143
      %p145 = scmp.eq.s32.totalorder %s18, 0
      %p146 = por %p144, %p145
      %p147 = scmp.le.s32.totalorder 1, %s12
      %p148 = scmp.lt.s32.totalorder %s12, 5
      %p149 = pnand %p147, %p148
      %p150 = pneg %p149
      // Predicated region
      $region9: #{graph_encoder_decoder_forward.9} parent=5 // pred_check
        _
      $region10: #{graph_encoder_decoder_forward.9} parent=5 // pred_check_branch
        %152 = sbr.rel (%p149) target = $region12
      $region11: #{graph_encoder_decoder_forward.9} parent=5 // pred_region
        %s153 = ssub.s32 %s12, 1
        // Predicated region
        $region13: #{graph_encoder_decoder_forward.9} parent=11 // pred_check
          %p154 = pneg %p57
        $region14: #{graph_encoder_decoder_forward.9} parent=11 // pred_check_branch
          %156 = sbr.rel (%p154) target = $region16
        $region15: #{graph_encoder_decoder_forward.9} parent=11 // pred_region
          %s157 = smul.u32 2, %s22
          %p158 = scmp.lt.s32.totalorder %s157, 1
          %s159 = scalar_select %p158, %s157, 1
          %s160 = smul.addr %s159, 4
          %s161 = scalar_lea.vmem %s0, %s160
          %s162 = smul.u32 2, %s22
        $region16: #{graph_encoder_decoder_forward.9} parent=11 // pred_fallthru
          _
        // Predicated region
        $region17: #{graph_encoder_decoder_forward.9} parent=11 // pred_check
          %p163 = pneg %p83
        $region18: #{graph_encoder_decoder_forward.9} parent=11 // pred_check_branch
          %165 = sbr.rel (%p163) target = $region20
        $region19: #{graph_encoder_decoder_forward.9} parent=11 // pred_region
          %p166 = scmp.lt.s32.totalorder %s23, 0
          %s167 = scalar_select %p166, %s23, 0
          %s168 = smul.addr %s167, 4
          %s169 = scalar_lea.vmem %s1, %s168
        $region20: #{graph_encoder_decoder_forward.9} parent=11 // pred_fallthru
          _
      $region12: #{graph_encoder_decoder_forward.9} parent=5 // pred_fallthru
        _
      %p170 = scmp.lt.s32.totalorder %s12, 4
      // Predicated region
      $region21: #{graph_encoder_decoder_forward.9} parent=5 // pred_check
        %p171 = pneg %p170
      $region22: #{graph_encoder_decoder_forward.9} parent=5 // pred_check_branch
        %173 = sbr.rel (%p171) target = $region24
      $region23: #{graph_encoder_decoder_forward.9} parent=5 // pred_region
        // Predicated region
        $region25: #{graph_encoder_decoder_forward.9} parent=23 // pred_check
          %p174 = pneg %p103
        $region26: #{graph_encoder_decoder_forward.9} parent=23 // pred_check_branch
          %176 = sbr.rel (%p174) target = $region28
        $region27: #{graph_encoder_decoder_forward.9} parent=23 // pred_region
          %p177 = scmp.lt.s32.totalorder %s21, 3
          %s178 = scalar_select %p177, %s21, 3
          %s179 = scalar_lea.vmem %s2, %s178
        $region28: #{graph_encoder_decoder_forward.9} parent=23 // pred_fallthru
          _
      $region24: #{graph_encoder_decoder_forward.9} parent=5 // pred_fallthru
        _
      %p180 = scmp.le.s32.totalorder 1, %s12
      %p181 = scmp.lt.s32.totalorder %s12, 5
      %p182 = pnand %p180, %p181
      %p183 = pneg %p182
      // Predicated region
      $region29: #{graph_encoder_decoder_forward.9} parent=5 // pred_check
        _
      $region30: #{graph_encoder_decoder_forward.9} parent=5 // pred_check_branch
        %185 = sbr.rel (%p182) target = $region32
      $region31: #{graph_encoder_decoder_forward.9} parent=5 // pred_region
        %s186 = ssub.s32 %s12, 1
        %s187 = smul.u32 2, %s22
        %p188 = scmp.lt.s32.totalorder %s187, 1
        %s189 = scalar_select %p188, %s187, 1
        %s190 = smul.addr %s189, 4
        %s191 = scalar_lea.vmem %s0, %s190
        %p192 = pneg %p57
        %p193 = pneg %p54
        %p194 = scmp.lt.s32.totalorder %s23, 0
        %s195 = scalar_select %p194, %s23, 0
        %s196 = smul.addr %s195, 4
        %s197 = scalar_lea.vmem %s1, %s196
        %p198 = pneg %p83
        %p199 = pneg %p80
        %p200 = scmp.lt.s32.totalorder %s24, 3
        %s201 = scalar_select %p200, %s24, 3
        %s202 = scalar_lea.vmem %s2, %s201
        %p203 = pneg %p109
        %p204 = pneg %p106
        %p205 = pneg %p139
        %p206 = pneg %p136
        %s207 = sand.u32 %s126, 1
        %s208 = scalar_lea.sflag [#allocation3], %s207
        %s209 = sand.u32 %s126, 1
        %s210 = smul.addr %s209, 16
        %s211 = scalar_lea.vmem [#allocation2], %s210
        %s212 = smul.u32 2, %s22
        %p213 = scmp.lt.s32.totalorder %s212, 1
        %s214 = scalar_select %p213, %s212, 1
        %s215 = smul.addr %s214, 4
        %s216 = scalar_lea.vmem %s0, %s215
        %s217 = smul.u32 2, %s22
        %p218 = scmp.lt.s32.totalorder %s23, 0
        %s219 = scalar_select %p218, %s23, 0
        %s220 = smul.addr %s219, 4
        %s221 = scalar_lea.vmem %s1, %s220
        %p222 = scmp.lt.s32.totalorder %s24, 3
        %s223 = scalar_select %p222, %s24, 3
        %s224 = scalar_lea.vmem %s2, %s223
        %s225 = smul.u32 2, %s22
        %v227 = vld [vmem:[%s216] sm:$0xf]
        %v228 = vld [vmem:[%s216 + $0x4] sm:$0xf]
        %v229 = vld [vmem:[%s224] sm:$0x1]
        %v230 = vunpack.c.l.bf16 %v227
        %v231 = vunpack.c.l.bf16 %v228
        %v233 = vlaneseq
        %v234 = vshrl.u32 %v233, 7
        %v235 = vsub.s32 0, %v234
        %v236 = vrot.slane %v229, %v235
        %v238 = vmul.f32 %v230, %v236
        %v239 = vmul.f32 %v231, %v236
        %v240 = vpack.c.bf16 %v239, %v238
        %v241 = vld [vmem:[%s221] sm:$0xf]
        %v242 = vld [vmem:[%s221 + $0x4] sm:$0xf]
        %v243 = vld [vmem:[%s221 + $0x8] sm:$0xf]
        %v244 = vld [vmem:[%s221 + $0xc] sm:$0xf]
        %v249 = vunpack.c.l.b16 %v241
        %v250 = vunpack.c.l.b16 %v242
        %v251 = vunpack.c.l.b16 %v243
        %v252 = vunpack.c.l.b16 %v244
        %v253 = vpack.c.b16 %v250, %v249
        %v254 = vpack.c.b16 %v252, %v251
        %vm257 = vcmask 261120
        %v259 = vsel %vm257, %v240, 0
        %261 = vmatprep.subr.bf16.mxu0 0
        %262 = vmatpush1.bf16.msra.mxu0 0
        %263 = vmatprep.subr.bf16.mxu0 0
        %264 = vmatpush1.bf16.msra.mxu0 0
        %265 = vmatprep.subr.bf16.mxu0 0
        %266 = vmatpush1.bf16.msra.mxu0 0
        %267 = vmatprep.subr.bf16.mxu0 0
        %268 = vmatpush1.bf16.msra.mxu0 0
        %269 = vmatprep.subr.bf16.mxu0 0
        %270 = vmatpush1.bf16.msra.mxu0 0
        %271 = vmatprep.subr.bf16.mxu0 0
        %272 = vmatpush1.bf16.msra.mxu0 0
        %273 = vmatprep.subr.bf16.mxu0 0
        %274 = vmatpush1.bf16.msra.mxu0 %v254
        %275 = vmatprep.subr.bf16.mxu0 0
        %276 = vmatpush1.bf16.msra.mxu0 %v253
        %277 = vmatprep.subr.bf16.mxu0 0
        %278 = vmatpush2.bf16.msra.mxu0 0
        %279 = vmatprep.subr.bf16.mxu0 0
        %280 = vmatpush2.bf16.msra.mxu0 0
        %281 = vmatprep.subr.bf16.mxu0 0
        %282 = vmatpush2.bf16.msra.mxu0 0
        %283 = vmatprep.subr.bf16.mxu0 0
        %284 = vmatpush2.bf16.msra.mxu0 0
        %285 = vmatprep.subr.bf16.mxu0 0
        %286 = vmatpush2.bf16.msra.mxu0 0
        %287 = vmatprep.subr.bf16.mxu0 0
        %288 = vmatpush2.bf16.msra.mxu0 0
        %289 = vmatprep.subr.bf16.mxu0 0
        %290 = vmatpush2.bf16.msra.mxu0 0
        %291 = vmatprep.subr.bf16.mxu0 0
        %292 = vmatpush2.bf16.msra.mxu0 0
        %293 = vmatprep.mubr.bf16.mxu0 0
        %294 = vmatmul.mubr.bf16.gmra.mxu0 %v259
        %v295 = vpop.f32.mrf.mxu0
        %v296 = vadd.f32 0.0, %v295
        %v297 = vpop.f32.mrf.mxu0
        %v298 = vpop.f32.mrf.mxu0
        %v299 = vadd.f32 0.0, %v298
        %v300 = vpop.f32.mrf.mxu0
        %301 = vdwg.mxu0
        %vm302 = vcmask 130048
        %303 = vst.msk [vmem:[%s211] sm:$0xff] %vm302, %v296
        %304 = vst.msk [vmem:[%s211 + $0x8] sm:$0xff] %vm302, %v299
        %s305 = sand.u32 %s126, 1
        %s306 = scalar_lea.sflag [#allocation3], %s305
        %s307 = sand.u32 %s126, 1
        %s308 = smul.addr %s307, 16
        %s309 = scalar_lea.vmem [#allocation2], %s308
        // Predicated region
        $region33: #{graph_encoder_decoder_forward.9} parent=31 // pred_check
          %p310 = pneg %p136
        $region34: #{graph_encoder_decoder_forward.9} parent=31 // pred_check_branch
          %312 = sbr.rel (%p310) target = $region36
        $region35: #{graph_encoder_decoder_forward.9} parent=31 // pred_region
          %s313 = smul.u32 2, %s22
          %s315 = ssub.s32 256, 256
          %316 = vsyncadd %s306, %s315
          %s317 = sadd.s32 %s23, %s313
          %s318 = smul.addr %s24, 2
          %s319 = sadd.s32 %s317, %s318
          %s320 = smul.addr %s319, 128
          %s321 = scalar_lea.hbm %s3, %s320
          %s322 = sshll.u32 %s309, 4
          %s323 = int_to_ptr.vmem [resolvable:$true] %s322
          %328 = dma.vmem_to_hbm [thread:$0]  %s323, 256, %s321, %s306, 128, 128, 8
        $region36: #{graph_encoder_decoder_forward.9} parent=31 // pred_fallthru
          _
      $region32: #{graph_encoder_decoder_forward.9} parent=5 // pred_fallthru
        _
      %p329 = scmp.le.s32.totalorder 2, %s12
      // Predicated region
      $region37: #{graph_encoder_decoder_forward.9} parent=5 // pred_check
        %p330 = pneg %p329
      $region38: #{graph_encoder_decoder_forward.9} parent=5 // pred_check_branch
        %332 = sbr.rel (%p330) target = $region40
      $region39: #{graph_encoder_decoder_forward.9} parent=5 // pred_region
        %s333 = ssub.s32 %s12, 2
        // Predicated region
        $region41: #{graph_encoder_decoder_forward.9} parent=39 // pred_check
          %p334 = pneg %p142
        $region42: #{graph_encoder_decoder_forward.9} parent=39 // pred_check_branch
          %336 = sbr.rel (%p334) target = $region44
        $region43: #{graph_encoder_decoder_forward.9} parent=39 // pred_region
          %s337 = sand.u32 %s127, 1
          %s338 = scalar_lea.sflag [#allocation3], %s337
          %s339 = sand.u32 %s127, 1
          %s340 = smul.addr %s339, 16
          %s341 = scalar_lea.vmem [#allocation2], %s340
          %342 = dma.done %s338, 256
        $region44: #{graph_encoder_decoder_forward.9} parent=39 // pred_fallthru
          _
      $region40: #{graph_encoder_decoder_forward.9} parent=5 // pred_fallthru
        _
    $region6: #{graph_encoder_decoder_forward.9} parent=1 // loop_footer
      %s16 = sadd.s32 1, %s12
    $region7: #{graph_encoder_decoder_forward.9} parent=1 // loop_footer_branch
      %11 = sbr.rel target = $region3
    $region8: #{graph_encoder_decoder_forward.9} parent=1 // loop_exit
      _
    %343 = vsyncpa [#allocation3], 1
    %s344 = scalar_lea.sflag [#allocation3], 1
    %345 = vsyncpa %s344, 1

</llo_original>
